<compile_context>
chip_gen: v5e
topology: v5e:2x2
jax: 0.10.0
libtpu: 0.0.40
codegen_flags: <defaults>
</compile_context>

<pallas_src>
import math

import jax
import jax.numpy as jnp
from jax.experimental import pallas as pl
from jax.experimental.pallas import tpu as pltpu


def _logistic_kernel(x_ref, w_ref, b_ref, o_ref):
    # Matmul on the MXU with f32 accumulation, bias add on the VPU.
    acc = jnp.dot(x_ref[...], w_ref[...], preferred_element_type=jnp.float32)
    o_ref[...] = (acc + b_ref[...]).astype(o_ref.dtype)


def _round_up(x, m):
    return ((x + m - 1) // m) * m


def mnist_logistic_forward(x, w, b, *, tile_m=None, out_dtype=None):
    """Computes x @ w + b with a Pallas TPU kernel.

    x: (M, K) float32 or bfloat16
    w: (K, N) same dtype family as x
    b: (N,)   float32
    returns (M, N) in `out_dtype` (defaults to x.dtype)
    """
    M, K = x.shape
    Kw, N = w.shape
    assert K == Kw and b.shape == (N,)
    if out_dtype is None:
        out_dtype = x.dtype

    x_bytes = x.dtype.itemsize
    w_bytes = w.dtype.itemsize
    out_bytes = jnp.dtype(out_dtype).itemsize
    # bf16 packs 2 rows/sublane -> minimum row tile of 16; f32 -> 8.
    row_align = 16 if x.dtype == jnp.bfloat16 else 8

    # --- choose the row tiling --------------------------------------------
    if tile_m is None:
        # Target ~4 MiB per X pipeline buffer (double-buffered -> ~8 MiB),
        # capped at 8192 rows.  Fits v5e's 16 MiB scoped-VMEM default.
        tm = (4 << 20) // max(1, K * x_bytes)
        tm = max(row_align, min(8192, (tm // row_align) * row_align))
    else:
        tm = tile_m

    if M <= tm:
        if M >= 2048:
            # Large single-block case: split into 2 aligned blocks so the
            # "parallel" grid axis spans both TensorCores on v7x.
            tm = min(M, _round_up(pl.cdiv(M, 2), row_align))
        else:
            # Whole problem in one block: no pipelining overhead and no
            # alignment constraint (block spans the full batch dim).
            tm = M

    grid_m = pl.cdiv(M, tm)
    if grid_m > 1:
        assert tm % row_align == 0, (
            f"tile_m must be a multiple of {row_align} for dtype {x.dtype}"
        )

    b2d = b.reshape(1, N).astype(jnp.float32)  # 2-D f32 bias tile

    # --- compiler params / cost estimate ------------------------------------
    vmem_est = (
        2 * tm * K * x_bytes          # double-buffered X tile
        + 2 * tm * N * out_bytes      # double-buffered output tile
        + K * N * w_bytes + 4 * N     # resident W + bias
        + (1 << 20)                   # margin
    )
    compiler_kwargs = dict(dimension_semantics=("parallel",))
    if vmem_est > (12 << 20):
        # Only needed when a caller forces very large tiles (v5e default is 16 MiB).
        compiler_kwargs["vmem_limit_bytes"] = min(vmem_est + (4 << 20), 64 << 20)

    cost = pl.CostEstimate(
        flops=2 * M * K * N,
        transcendentals=0,
        bytes_accessed=M * K * x_bytes + K * N * w_bytes + 4 * N + M * N * out_bytes,
    )

    out = pl.pallas_call(
        _logistic_kernel,
        out_shape=jax.ShapeDtypeStruct((M, N), out_dtype),
        grid_spec=pltpu.PrefetchScalarGridSpec(
            num_scalar_prefetch=0,
            grid=(grid_m,),
            in_specs=[
                pl.BlockSpec((tm, K), lambda i: (i, 0)),  # row-tile of X
                pl.BlockSpec((K, N), lambda i: (0, 0)),   # full W, resident across grid
                pl.BlockSpec((1, N), lambda i: (0, 0)),   # bias, resident across grid
            ],
            out_specs=pl.BlockSpec((tm, N), lambda i: (i, 0)),
        ),
        compiler_params=pltpu.CompilerParams(**compiler_kwargs),
        cost_estimate=cost,
    )(x, w, b2d)

    return out


if __name__ == "__main__":
    # Small synthetic shapes consistent with the module:
    # input_dim=128, output_dim=16, batch=16.
    input_dim, output_dim, batch = 128, 16, 16

    key = jax.random.PRNGKey(0)
    kx, kw, kx2 = jax.random.split(key, 3)

    # Deterministic init mirroring torch.randn(in, out)/sqrt(in) and zeros(out).
    weights = (
        jax.random.normal(kw, (input_dim, output_dim), dtype=jnp.float32)
        / math.sqrt(input_dim)
    )
    bias = jnp.zeros((output_dim,), dtype=jnp.float32)

    data_x = jax.random.normal(kx, (batch, input_dim), dtype=jnp.float32)

    # 1) Small-batch path: single block, grid=(1,).
    out = jax.block_until_ready(mnist_logistic_forward(data_x, weights, bias))
    ref = data_x @ weights + bias
    assert out.shape == (batch, output_dim)
    assert out.dtype == jnp.float32
    assert jnp.allclose(out, ref, atol=1e-5, rtol=1e-5)

    # 2) Tiled path with a non-divisible batch: grid=cdiv(50,16)=4, boundary
    #    block handled by Pallas output masking (no padding / slicing copies).
    batch2 = 50
    data_x2 = jax.random.normal(kx2, (batch2, input_dim), dtype=jnp.float32)
    out2 = jax.block_until_ready(
        mnist_logistic_forward(data_x2, weights, bias, tile_m=16)
    )
    ref2 = data_x2 @ weights + bias
    assert out2.shape == (batch2, output_dim)
    assert jnp.allclose(out2, ref2, atol=1e-5, rtol=1e-5)

    # 3) Genuinely-bf16 inputs (no wrapper-side cast): f32 MXU accumulation,
    #    bf16 output; compare against an f32 reference on the rounded inputs.
    x_bf = data_x.astype(jnp.bfloat16)
    w_bf = weights.astype(jnp.bfloat16)
    out3 = jax.block_until_ready(mnist_logistic_forward(x_bf, w_bf, bias))
    ref3 = x_bf.astype(jnp.float32) @ w_bf.astype(jnp.float32) + bias
    assert out3.dtype == jnp.bfloat16
    assert jnp.allclose(out3.astype(jnp.float32), ref3, atol=2e-2, rtol=2e-2)

    print("KERNEL_OK")
</pallas_src>

<mosaic_0001>
module attributes {stable_mosaic.version = 11 : i64} {
  func.func @_logistic_kernel(%arg0: i32, %arg1: memref<16x128xf32, #tpu.memory_space<vmem>>, %arg2: memref<128x16xf32, #tpu.memory_space<vmem>>, %arg3: memref<1x16xf32, #tpu.memory_space<vmem>>, %arg4: memref<16x16xf32, #tpu.memory_space<vmem>>) attributes {dimension_semantics = [#tpu.dimension_semantics<parallel>], iteration_bounds = array<i64: 1>, scalar_prefetch = 0 : i64, scratch_operands = 0 : i64, tpu.core_type = #tpu.core_type<tc>, window_params = [{transform_indices = @transform_0, window_bounds = array<i64: 16, 128>}, {pipeline_mode = #tpu.pipeline_mode<synchronous>, transform_indices = @transform_1, window_bounds = array<i64: 128, 16>}, {pipeline_mode = #tpu.pipeline_mode<synchronous>, transform_indices = @transform_2, window_bounds = array<i64: 1, 16>}, {transform_indices = @transform_3, window_bounds = array<i64: 16, 16>}]} {
    %c0 = arith.constant 0 : index
    %c0_0 = arith.constant 0 : index
    %0 = vector.load %arg1[%c0, %c0_0] : memref<16x128xf32, #tpu.memory_space<vmem>>, vector<16x128xf32>
    %c0_1 = arith.constant 0 : index
    %c0_2 = arith.constant 0 : index
    %1 = vector.load %arg2[%c0_1, %c0_2] : memref<128x16xf32, #tpu.memory_space<vmem>>, vector<128x16xf32>
    %cst = arith.constant dense<0.000000e+00> : vector<16x16xf32>
    %2 = tpu.matmul %0, %1, %cst {dimension_numbers = #tpu.dot_dimension_numbers<[1], [0], [0], [1], [0, 0, 1, 1], [], []>} : vector<16x128xf32>, vector<128x16xf32>, vector<16x16xf32> -> vector<16x16xf32>
    %c0_3 = arith.constant 0 : index
    %c0_4 = arith.constant 0 : index
    %3 = vector.load %arg3[%c0_3, %c0_4] : memref<1x16xf32, #tpu.memory_space<vmem>>, vector<1x16xf32>
    %4 = vector.broadcast %3 : vector<1x16xf32> to vector<16x16xf32>
    %5 = arith.addf %2, %4 : vector<16x16xf32>
    %c0_5 = arith.constant 0 : index
    %c0_6 = arith.constant 0 : index
    %6 = vector.load %arg4[%c0_5, %c0_6] : memref<16x16xf32, #tpu.memory_space<vmem>>, vector<16x16xf32>
    tpu.vector_store %arg4[%c0_5, %c0_6], %5 {strides = array<i32>} : memref<16x16xf32, #tpu.memory_space<vmem>>, vector<16x16xf32>,
    return
  }
  func.func @transform_0(%arg0: i32) -> (i32, i32) {
    %c0_i32 = arith.constant 0 : i32
    %c0_i32_0 = arith.constant 0 : i32
    return %arg0, %c0_i32 : i32, i32
  }
  func.func @transform_1(%arg0: i32) -> (i32, i32) {
    %c0_i32 = arith.constant 0 : i32
    %c0_i32_0 = arith.constant 0 : i32
    %c0_i32_1 = arith.constant 0 : i32
    return %c0_i32, %c0_i32_0 : i32, i32
  }
  func.func @transform_2(%arg0: i32) -> (i32, i32) {
    %c0_i32 = arith.constant 0 : i32
    %c0_i32_0 = arith.constant 0 : i32
    %c0_i32_1 = arith.constant 0 : i32
    return %c0_i32, %c0_i32_0 : i32, i32
  }
  func.func @transform_3(%arg0: i32) -> (i32, i32) {
    %c0_i32 = arith.constant 0 : i32
    %c0_i32_0 = arith.constant 0 : i32
    return %arg0, %c0_i32 : i32, i32
  }
}

</mosaic_0001>

<llo_original>
// kernel: tpu_custom_call.1
$region0: #{tpu_custom_call.1}
  #allocation0 [shape = 'u32[]', space=smem, size = 0x4, offset = 0x4, fixed_abs, tag = 'smem constant byte address 0x4 - core index']
  #allocation1 [shape = 'u32[72,128]{1,0:T(1,128)}', space=vmem, size = 0x9000, scoped, tag = 'internal scratch']
  %s0 = inlined_call_operand.vmem [shape: f32[16,128], index: 0, kind: input, shape index: {}]
  %s1 = inlined_call_operand.vmem [shape: f32[128,16], index: 1, kind: input, shape index: {}]
  %s2 = inlined_call_operand.vmem [shape: f32[1,16], index: 2, kind: input, shape index: {}]
  %s3 = inlined_call_operand.hbm [shape: f32[16,16], index: 3, kind: output, shape index: {}]
  %s4 = sld [smem:[#allocation0]]
  $region22: #{tpu_custom_call.1} parent=0
    _
  %s6 = ssub.s32 1, %s4
  %s7 = scalar_select 0, %s6, %s4
  $region1: #{tpu_custom_call.1} parent=0
    #allocation2 [shape = 'u8[8192]{0}', space=vmem, size = 0x2000, scoped, tag = 'output window, operand 0, single buffered']
    #allocation3 [shape = 's32[1]{0}', space=sflag, size = 0x4, scoped, tag = 'scoped memory for tpu_custom_call.1']
    %8 = vsyncpa [#allocation3], 0
    // Predicated region
    $region2: #{tpu_custom_call.1} parent=1 // pred_check
      _
    $region3: #{tpu_custom_call.1} parent=1 // pred_check_branch
      %10 = sbr.rel (0) target = $region5
    $region4: #{tpu_custom_call.1} parent=1 // pred_region
      _
    $region5: #{tpu_custom_call.1} parent=1 // pred_fallthru
      _
    // Predicated region
    $region6: #{tpu_custom_call.1} parent=1 // pred_check
      _
    $region7: #{tpu_custom_call.1} parent=1 // pred_check_branch
      %12 = sbr.rel (0) target = $region9
    $region8: #{tpu_custom_call.1} parent=1 // pred_region
      _
    $region9: #{tpu_custom_call.1} parent=1 // pred_fallthru
      _
    // Predicated region
    $region10: #{tpu_custom_call.1} parent=1 // pred_check
      _
    $region11: #{tpu_custom_call.1} parent=1 // pred_check_branch
      %14 = sbr.rel (0) target = $region13
    $region12: #{tpu_custom_call.1} parent=1 // pred_region
      _
    $region13: #{tpu_custom_call.1} parent=1 // pred_fallthru
      _
    %v15 = vld [vmem:[%s0] sm:$0xff]
    %v16 = vld [vmem:[%s0 + $0x8] sm:$0xff]
    %v17 = vld [vmem:[%s1] sm:$0xff]
    %v18 = vld [vmem:[%s1 + $0x8] sm:$0xff]
    %v19 = vld [vmem:[%s1 + $0x10] sm:$0xff]
    %v20 = vld [vmem:[%s1 + $0x18] sm:$0xff]
    %v21 = vld [vmem:[%s1 + $0x20] sm:$0xff]
    %v22 = vld [vmem:[%s1 + $0x28] sm:$0xff]
    %v23 = vld [vmem:[%s1 + $0x30] sm:$0xff]
    %v24 = vld [vmem:[%s1 + $0x38] sm:$0xff]
    %v25 = vld [vmem:[%s1 + $0x40] sm:$0xff]
    %v26 = vld [vmem:[%s1 + $0x48] sm:$0xff]
    %v27 = vld [vmem:[%s1 + $0x50] sm:$0xff]
    %v28 = vld [vmem:[%s1 + $0x58] sm:$0xff]
    %v29 = vld [vmem:[%s1 + $0x60] sm:$0xff]
    %v30 = vld [vmem:[%s1 + $0x68] sm:$0xff]
    %v31 = vld [vmem:[%s1 + $0x70] sm:$0xff]
    %v32 = vld [vmem:[%s1 + $0x78] sm:$0xff]
    %v33 = vld [vmem:[%s2] sm:$0x1]
    %v35 = vperm.slane %v33, 0
    %37 = vmatpush.msra.mxu0 %v32
    %38 = vmatpush.msra.mxu0 %v31
    %39 = vmatpush.msra.mxu0 %v30
    %40 = vmatpush.msra.mxu0 %v29
    %41 = vmatpush.msra.mxu0 %v28
    %42 = vmatpush.msra.mxu0 %v27
    %43 = vmatpush.msra.mxu0 %v26
    %44 = vmatpush.msra.mxu0 %v25
    %45 = vmatpush.msra.mxu0 %v24
    %46 = vmatpush.msra.mxu0 %v23
    %47 = vmatpush.msra.mxu0 %v22
    %48 = vmatpush.msra.mxu0 %v21
    %49 = vmatpush.msra.mxu0 %v20
    %50 = vmatpush.msra.mxu0 %v19
    %51 = vmatpush.msra.mxu0 %v18
    %52 = vmatpush.msra.mxu0 %v17
    %53 = vmatmul.f32.gmra.mxu0 %v15
    %v54 = vpop.f32.mrf.mxu0
    %v55 = vadd.f32 %v35, %v54
    %56 = vmatmul.f32.gmra.mxu0 %v16
    %v57 = vpop.f32.mrf.mxu0
    %v58 = vadd.f32 %v35, %v57
    %59 = vdwg.mxu0
    %vm60 = vcmask 130048
    %61 = vst.msk [vmem:[#allocation2] sm:$0xff] %vm60, %v55
    %62 = vst.msk [vmem:[#allocation2 + $0x8] sm:$0xff] %vm60, %v58
    // Predicated region
    $region14: #{tpu_custom_call.1} parent=1 // pred_check
      _
    $region15: #{tpu_custom_call.1} parent=1 // pred_check_branch
      %64 = sbr.rel (0) target = $region17
    $region16: #{tpu_custom_call.1} parent=1 // pred_region
      %66 = vsyncadd [#allocation3], 0
      %s67 = sshll.u32 [#allocation2], 4
      %s68 = int_to_ptr.vmem [resolvable:$true] %s67
      %s69 = sshll.u32 %s3, 4
      %s70 = int_to_ptr.hbm [resolvable:$true] %s69
      %75 = dma.vmem_to_hbm [thread:$0]  %s68, 256, %s70, [#allocation3], 128, 128, 8
    $region17: #{tpu_custom_call.1} parent=1 // pred_fallthru
      _
    // Predicated region
    $region18: #{tpu_custom_call.1} parent=1 // pred_check
      _
    $region19: #{tpu_custom_call.1} parent=1 // pred_check_branch
      %77 = sbr.rel (0) target = $region21
    $region20: #{tpu_custom_call.1} parent=1 // pred_region
      %79 = dma.done [#allocation3], 256
    $region21: #{tpu_custom_call.1} parent=1 // pred_fallthru
      _
    %80 = vsyncpa [#allocation3], 1

</llo_original>
